<compile_context>
chip_gen: v5e
topology: v5e:2x2
jax: 0.10.0
libtpu: 0.0.40
codegen_flags: <defaults>
</compile_context>

<pallas_src>
import functools
import math

import jax
import jax.numpy as jnp
from jax import lax
from jax.experimental import pallas as pl
from jax.experimental.pallas import tpu as pltpu


def _flash_attn_kernel(xq_ref, k_ref, v_ref, wq_ref, bq_ref, o_ref,
                       q_scr, m_scr, l_scr, acc_scr, *, scale, seq_len, masked):
    """One (batch, q-block, kv-block) step of fused Q-projection + online-softmax attention.

    xq_ref:  (Tq,  H) bf16  input rows for the query block
    k_ref:   (Tkv, H) bf16  pre-projected keys for this kv block
    v_ref:   (Tkv, H) bf16  pre-projected values for this kv block
    wq_ref:  (H, H)   bf16  Wq pre-transposed to [in, out]
    bq_ref:  (1, H)   f32   query bias
    o_ref:   (Tq, H)        output block
    scratch: q_scr (Tq,H) bf16, m_scr/l_scr (Tq,1) f32, acc_scr (Tq,H) f32
    """
    ki = pl.program_id(2)

    @pl.when(ki == 0)
    def _init():
        # Q projection exactly once per (batch, q-block); fold bias + softmax scale in,
        # store as bf16 so the Q.K^T matmul runs with bf16 MXU operands.
        q = lax.dot_general(xq_ref[...], wq_ref[...],
                            (((1,), (0,)), ((), ())),
                            preferred_element_type=jnp.float32)
        q = (q + bq_ref[...]) * scale
        q_scr[...] = q.astype(q_scr.dtype)
        m_scr[...] = jnp.full_like(m_scr, -jnp.inf)
        l_scr[...] = jnp.zeros_like(l_scr)
        acc_scr[...] = jnp.zeros_like(acc_scr)

    # scores = (scaled Q) K^T ; contract last dims of both -> no transpose, bf16 operands.
    s = lax.dot_general(q_scr[...], k_ref[...],
                        (((1,), (1,)), ((), ())),
                        preferred_element_type=jnp.float32)          # (Tq, Tkv) f32

    if masked:
        # Sequence was padded up to a tile multiple: mask out padded key columns.
        tkv = k_ref.shape[0]
        col = ki * tkv + lax.broadcasted_iota(jnp.int32, (1, tkv), 1)
        s = jnp.where(col < seq_len, s, jnp.float32(-1e30))

    # Online (streaming) softmax update; bookkeeping in f32 (v5e-safe).
    m_prev = m_scr[...]
    m_new = jnp.maximum(m_prev, jnp.max(s, axis=-1, keepdims=True))
    alpha = jnp.exp(m_prev - m_new)
    p = jnp.exp(s - m_new)
    l_scr[...] = alpha * l_scr[...] + jnp.sum(p, axis=-1, keepdims=True)
    acc_scr[...] = alpha * acc_scr[...] + jnp.dot(
        p.astype(v_ref.dtype), v_ref[...], preferred_element_type=jnp.float32)
    m_scr[...] = m_new

    @pl.when(ki == pl.num_programs(2) - 1)
    def _finalize():
        o_ref[...] = (acc_scr[...] *
                      pl.reciprocal(l_scr[...], approx=True)).astype(o_ref.dtype)


def _spec(block_shape, index_map, n_buffers=None):
    """BlockSpec with optional pipeline depth; fall back cleanly if unsupported."""
    if n_buffers is not None:
        try:
            return pl.BlockSpec(block_shape, index_map,
                                pipeline_mode=pl.Buffered(n_buffers))
        except (AttributeError, TypeError, ValueError):
            pass
    return pl.BlockSpec(block_shape, index_map)


def _plan_tiles(s, block_q, block_kv):
    """Pick q/kv sequence tiles and a padded length both tiles divide."""
    if s <= min(block_q, block_kv):
        # Small sequence: a single full-extent block on both axes, no padding.
        return s, s, s
    tq = max(8, (min(block_q, s) // 8) * 8)
    tkv = max(8, (min(block_kv, s) // 8) * 8)
    # Keep the tiles commensurate so the padded length stays small.
    if tq % tkv and tkv % tq:
        if tq < tkv:
            tkv = (tkv // tq) * tq
        else:
            tq = (tq // tkv) * tkv
    step = math.lcm(tq, tkv)
    s_pad = ((s + step - 1) // step) * step
    return tq, tkv, s_pad


def self_attention(x, wq, wk, wv, bq, bk, bv, *, block_q=512, block_kv=512):
    """x: (B, S, H); weights (H, H) stored PyTorch-style [out, in]; biases (H,)."""
    B, S, H = x.shape
    scale = float(H) ** (-0.5)
    tq, tkv, s_pad = _plan_tiles(S, block_q, block_kv)

    # --- one-time wrapper-side prep (plain XLA ops, outside the kernel) -----------------
    # K / V projected once for the whole sequence (f32 accumulate), stored bf16.
    k = (jnp.einsum("bsh,oh->bso", x, wk) + bk).astype(jnp.bfloat16)
    v = (jnp.einsum("bsh,oh->bso", x, wv) + bv).astype(jnp.bfloat16)
    xb = x.astype(jnp.bfloat16)                         # bf16 x tiles for the Q projection
    wq_t = jnp.transpose(wq).astype(jnp.bfloat16)       # (H, H) [in, out]
    bq2 = bq.reshape(1, H).astype(jnp.float32)

    masked = s_pad != S
    if masked:
        pad = ((0, 0), (0, s_pad - S), (0, 0))
        xb = jnp.pad(xb, pad)
        k = jnp.pad(k, pad)
        v = jnp.pad(v, pad)

    n_kv = s_pad // tkv
    grid = (B, s_pad // tq, n_kv)
    kernel = functools.partial(_flash_attn_kernel, scale=scale, seq_len=S, masked=masked)
    kv_buffers = 3 if n_kv > 2 else None   # hide the per-kv-step DMA once compute is bf16

    out = pl.pallas_call(
        kernel,
        out_shape=jax.ShapeDtypeStruct((B, s_pad, H), x.dtype),
        grid_spec=pltpu.PrefetchScalarGridSpec(
            num_scalar_prefetch=0,
            grid=grid,
            in_specs=[
                # x tile for the query block
                _spec((pl.Squeezed(), tq, H), lambda b, qi, ki: (b, qi, 0)),
                # pre-projected K / V tiles for the kv block
                _spec((pl.Squeezed(), tkv, H), lambda b, qi, ki: (b, ki, 0), kv_buffers),
                _spec((pl.Squeezed(), tkv, H), lambda b, qi, ki: (b, ki, 0), kv_buffers),
                # constant-index weight / bias tiles -> single-buffered
                _spec((H, H), lambda b, qi, ki: (0, 0), 1),
                _spec((1, H), lambda b, qi, ki: (0, 0), 1),
            ],
            out_specs=pl.BlockSpec((pl.Squeezed(), tq, H), lambda b, qi, ki: (b, qi, 0)),
            scratch_shapes=[
                pltpu.VMEM((tq, H), jnp.bfloat16),   # cached (scaled) Q
                pltpu.VMEM((tq, 1), jnp.float32),    # running max
                pltpu.VMEM((tq, 1), jnp.float32),    # running denom
                pltpu.VMEM((tq, H), jnp.float32),    # output accumulator
            ],
        ),
        compiler_params=pltpu.CompilerParams(
            dimension_semantics=("parallel", "parallel", "arbitrary"),
        ),
    )(xb, k, v, wq_t, bq2)

    return out[:, :S, :] if masked else out


def _reference(x, wq, wk, wv, bq, bk, bv):
    H = x.shape[-1]
    scale = float(H) ** (-0.5)
    q = jnp.einsum("bsh,oh->bso", x, wq) + bq
    k = jnp.einsum("bsh,oh->bso", x, wk) + bk
    v = jnp.einsum("bsh,oh->bso", x, wv) + bv
    scores = jnp.einsum("bqh,bkh->bqk", q, k) * scale
    w = jax.nn.softmax(scores, axis=-1)
    return jnp.einsum("bqk,bkh->bqh", w, v)


def _make_params(key, H):
    kwq, kwk, kwv, kbq, kbk, kbv = jax.random.split(key, 6)
    bound = 1.0 / (H ** 0.5)
    wq = jax.random.uniform(kwq, (H, H), jnp.float32, -bound, bound)
    wk = jax.random.uniform(kwk, (H, H), jnp.float32, -bound, bound)
    wv = jax.random.uniform(kwv, (H, H), jnp.float32, -bound, bound)
    bq = jax.random.uniform(kbq, (H,), jnp.float32, -bound, bound)
    bk = jax.random.uniform(kbk, (H,), jnp.float32, -bound, bound)
    bv = jax.random.uniform(kbv, (H,), jnp.float32, -bound, bound)
    return wq, wk, wv, bq, bk, bv


def _check(x, params, **kw):
    out = jax.block_until_ready(self_attention(x, *params, **kw))
    ref = _reference(x, *params)
    assert out.shape == ref.shape
    # bf16 MXU operands -> looser tolerance than a pure-f32 pipeline.
    assert jnp.allclose(out, ref, atol=2e-2, rtol=2e-2), "mismatch vs JAX reference"
    return out


if __name__ == "__main__":
    key = jax.random.PRNGKey(0)
    k_small, k_mid, k_big = jax.random.split(key, 3)

    # --- small shape matching the module's toy config (B=2, S=8, H=32): single-block path
    B, S, H = 2, 8, 32
    kx, kp = jax.random.split(k_small)
    x = jax.random.normal(kx, (B, S, H), dtype=jnp.float32)
    _check(x, _make_params(kp, H))

    # --- ragged sequence: exercises padding + in-kernel kv masking (S=640 -> pad to 1024)
    B2, S2, H2 = 2, 640, 128
    kx2, kp2 = jax.random.split(k_mid)
    x2 = jax.random.normal(kx2, (B2, S2, H2), dtype=jnp.float32)
    _check(x2, _make_params(kp2, H2))

    # --- larger, exactly-tiled shape: exercises the multi-kv-step online-softmax path
    B3, S3, H3 = 2, 1024, 128
    kx3, kp3 = jax.random.split(k_big)
    x3 = jax.random.normal(kx3, (B3, S3, H3), dtype=jnp.float32)
    _check(x3, _make_params(kp3, H3))

    print("KERNEL_OK")
</pallas_src>

<mosaic_0001>
module attributes {stable_mosaic.version = 11 : i64} {
  func.func @_flash_attn_kernel(%arg0: i32, %arg1: i32, %arg2: i32, %arg3: memref<1x8x32xbf16, #tpu.memory_space<vmem>>, %arg4: memref<1x8x32xbf16, #tpu.memory_space<vmem>>, %arg5: memref<1x8x32xbf16, #tpu.memory_space<vmem>>, %arg6: memref<32x32xbf16, #tpu.memory_space<vmem>>, %arg7: memref<1x32xf32, #tpu.memory_space<vmem>>, %arg8: memref<1x8x32xf32, #tpu.memory_space<vmem>>, %arg9: memref<8x32xbf16, #tpu.memory_space<vmem>>, %arg10: memref<8x1xf32, #tpu.memory_space<vmem>>, %arg11: memref<8x1xf32, #tpu.memory_space<vmem>>, %arg12: memref<8x32xf32, #tpu.memory_space<vmem>>) attributes {dimension_semantics = [#tpu.dimension_semantics<parallel>, #tpu.dimension_semantics<parallel>, #tpu.dimension_semantics<arbitrary>], iteration_bounds = array<i64: 2, 1, 1>, scalar_prefetch = 0 : i64, scratch_operands = 4 : i64, tpu.core_type = #tpu.core_type<tc>, window_params = [{transform_indices = @transform_0, window_bounds = array<i64: 1, 8, 32>}, {transform_indices = @transform_1, window_bounds = array<i64: 1, 8, 32>}, {transform_indices = @transform_2, window_bounds = array<i64: 1, 8, 32>}, {pipeline_mode = #tpu.pipeline_mode<synchronous>, transform_indices = @transform_3, window_bounds = array<i64: 32, 32>}, {pipeline_mode = #tpu.pipeline_mode<synchronous>, transform_indices = @transform_4, window_bounds = array<i64: 1, 32>}, {transform_indices = @transform_5, window_bounds = array<i64: 1, 8, 32>}]} {
    %c0_i32 = arith.constant 0 : i32
    %0 = arith.cmpi eq, %arg2, %c0_i32 : i32
    %1 = arith.extui %0 : i1 to i32
    %c0_i32_0 = arith.constant 0 : i32
    %2 = arith.cmpi ne, %1, %c0_i32_0 : i32
    scf.if %2 {
      %c0_25 = arith.constant 0 : index
      %c0_26 = arith.constant 0 : index
      %c0_27 = arith.constant 0 : index
      %35 = vector.load %arg3[%c0_25, %c0_26, %c0_27] : memref<1x8x32xbf16, #tpu.memory_space<vmem>>, vector<1x8x32xbf16>
      %36 = vector.shape_cast %35 : vector<1x8x32xbf16> to vector<8x32xbf16>
      %c0_28 = arith.constant 0 : index
      %c0_29 = arith.constant 0 : index
      %37 = vector.load %arg6[%c0_28, %c0_29] : memref<32x32xbf16, #tpu.memory_space<vmem>>, vector<32x32xbf16>
      %cst_30 = arith.constant dense<0.000000e+00> : vector<8x32xf32>
      %38 = tpu.matmul %36, %37, %cst_30 {dimension_numbers = #tpu.dot_dimension_numbers<[1], [0], [0], [1], [0, 0, 1, 1], [], []>} : vector<8x32xbf16>, vector<32x32xbf16>, vector<8x32xf32> -> vector<8x32xf32>
      %c0_31 = arith.constant 0 : index
      %c0_32 = arith.constant 0 : index
      %39 = vector.load %arg7[%c0_31, %c0_32] : memref<1x32xf32, #tpu.memory_space<vmem>>, vector<1x32xf32>
      %40 = vector.broadcast %39 : vector<1x32xf32> to vector<8x32xf32>
      %41 = arith.addf %38, %40 : vector<8x32xf32>
      %cst_33 = arith.constant 0.176776692 : f32
      %42 = vector.broadcast %cst_33 : f32 to vector<8x32xf32>
      %43 = arith.mulf %41, %42 : vector<8x32xf32>
      %44 = arith.truncf %43 : vector<8x32xf32> to vector<8x32xbf16>
      %c0_34 = arith.constant 0 : index
      %c0_35 = arith.constant 0 : index
      %45 = vector.load %arg9[%c0_34, %c0_35] : memref<8x32xbf16, #tpu.memory_space<vmem>>, vector<8x32xbf16>
      tpu.vector_store %arg9[%c0_34, %c0_35], %44 {strides = array<i32>} : memref<8x32xbf16, #tpu.memory_space<vmem>>, vector<8x32xbf16>,
      %cst_36 = arith.constant 0xFF800000 : f32
      %46 = vector.broadcast %cst_36 : f32 to vector<8x1xf32>
      %c0_37 = arith.constant 0 : index
      %c0_38 = arith.constant 0 : index
      %47 = vector.load %arg10[%c0_37, %c0_38] : memref<8x1xf32, #tpu.memory_space<vmem>>, vector<8x1xf32>
      tpu.vector_store %arg10[%c0_37, %c0_38], %46 {strides = array<i32>} : memref<8x1xf32, #tpu.memory_space<vmem>>, vector<8x1xf32>,
      %cst_39 = arith.constant 0.000000e+00 : f32
      %48 = vector.broadcast %cst_39 : f32 to vector<8x1xf32>
      %c0_40 = arith.constant 0 : index
      %c0_41 = arith.constant 0 : index
      %49 = vector.load %arg11[%c0_40, %c0_41] : memref<8x1xf32, #tpu.memory_space<vmem>>, vector<8x1xf32>
      tpu.vector_store %arg11[%c0_40, %c0_41], %48 {strides = array<i32>} : memref<8x1xf32, #tpu.memory_space<vmem>>, vector<8x1xf32>,
      %cst_42 = arith.constant 0.000000e+00 : f32
      %50 = vector.broadcast %cst_42 : f32 to vector<8x32xf32>
      %c0_43 = arith.constant 0 : index
      %c0_44 = arith.constant 0 : index
      %51 = vector.load %arg12[%c0_43, %c0_44] : memref<8x32xf32, #tpu.memory_space<vmem>>, vector<8x32xf32>
      tpu.vector_store %arg12[%c0_43, %c0_44], %50 {strides = array<i32>} : memref<8x32xf32, #tpu.memory_space<vmem>>, vector<8x32xf32>,
    } else {
    }
    %c0 = arith.constant 0 : index
    %c0_1 = arith.constant 0 : index
    %3 = vector.load %arg9[%c0, %c0_1] : memref<8x32xbf16, #tpu.memory_space<vmem>>, vector<8x32xbf16>
    %c0_2 = arith.constant 0 : index
    %c0_3 = arith.constant 0 : index
    %c0_4 = arith.constant 0 : index
    %4 = vector.load %arg4[%c0_2, %c0_3, %c0_4] : memref<1x8x32xbf16, #tpu.memory_space<vmem>>, vector<1x8x32xbf16>
    %5 = vector.shape_cast %4 : vector<1x8x32xbf16> to vector<8x32xbf16>
    %cst = arith.constant dense<0.000000e+00> : vector<8x8xf32>
    %6 = tpu.matmul %3, %5, %cst {dimension_numbers = #tpu.dot_dimension_numbers<[1], [1], [0], [0], [0, 0, 1, 0], [], []>} : vector<8x32xbf16>, vector<8x32xbf16>, vector<8x8xf32> -> vector<8x8xf32>
    %c0_5 = arith.constant 0 : index
    %c0_6 = arith.constant 0 : index
    %7 = vector.load %arg10[%c0_5, %c0_6] : memref<8x1xf32, #tpu.memory_space<vmem>>, vector<8x1xf32>
    %cst_7 = arith.constant dense<0xFF800000> : vector<8xf32>
    %8 = vector.multi_reduction <maximumf>, %6, %cst_7 [1] : vector<8x8xf32> to vector<8xf32>
    %9 = vector.shape_cast %8 : vector<8xf32> to vector<8x1xf32>
    %10 = arith.maximumf %7, %9 : vector<8x1xf32>
    %11 = arith.subf %7, %10 : vector<8x1xf32>
    %12 = math.exp %11 : vector<8x1xf32>
    %13 = vector.broadcast %10 : vector<8x1xf32> to vector<8x8xf32>
    %14 = arith.subf %6, %13 : vector<8x8xf32>
    %15 = math.exp %14 : vector<8x8xf32>
    %c0_8 = arith.constant 0 : index
    %c0_9 = arith.constant 0 : index
    %16 = vector.load %arg11[%c0_8, %c0_9] : memref<8x1xf32, #tpu.memory_space<vmem>>, vector<8x1xf32>
    %17 = arith.mulf %12, %16 : vector<8x1xf32>
    %cst_10 = arith.constant dense<0.000000e+00> : vector<8xf32>
    %18 = vector.multi_reduction <add>, %15, %cst_10 [1] : vector<8x8xf32> to vector<8xf32>
    %19 = vector.shape_cast %18 : vector<8xf32> to vector<8x1xf32>
    %20 = arith.addf %17, %19 : vector<8x1xf32>
    %c0_11 = arith.constant 0 : index
    %c0_12 = arith.constant 0 : index
    %21 = vector.load %arg11[%c0_11, %c0_12] : memref<8x1xf32, #tpu.memory_space<vmem>>, vector<8x1xf32>
    tpu.vector_store %arg11[%c0_11, %c0_12], %20 {strides = array<i32>} : memref<8x1xf32, #tpu.memory_space<vmem>>, vector<8x1xf32>,
    %c0_13 = arith.constant 0 : index
    %c0_14 = arith.constant 0 : index
    %22 = vector.load %arg12[%c0_13, %c0_14] : memref<8x32xf32, #tpu.memory_space<vmem>>, vector<8x32xf32>
    %23 = vector.broadcast %12 : vector<8x1xf32> to vector<8x32xf32>
    %24 = arith.mulf %23, %22 : vector<8x32xf32>
    %25 = arith.truncf %15 : vector<8x8xf32> to vector<8x8xbf16>
    %c0_15 = arith.constant 0 : index
    %c0_16 = arith.constant 0 : index
    %c0_17 = arith.constant 0 : index
    %26 = vector.load %arg5[%c0_15, %c0_16, %c0_17] : memref<1x8x32xbf16, #tpu.memory_space<vmem>>, vector<1x8x32xbf16>
    %27 = vector.shape_cast %26 : vector<1x8x32xbf16> to vector<8x32xbf16>
    %cst_18 = arith.constant dense<0.000000e+00> : vector<8x32xf32>
    %28 = tpu.matmul %25, %27, %cst_18 {dimension_numbers = #tpu.dot_dimension_numbers<[1], [0], [0], [1], [0, 0, 1, 1], [], []>} : vector<8x8xbf16>, vector<8x32xbf16>, vector<8x32xf32> -> vector<8x32xf32>
    %29 = arith.addf %24, %28 : vector<8x32xf32>
    %c0_19 = arith.constant 0 : index
    %c0_20 = arith.constant 0 : index
    %30 = vector.load %arg12[%c0_19, %c0_20] : memref<8x32xf32, #tpu.memory_space<vmem>>, vector<8x32xf32>
    tpu.vector_store %arg12[%c0_19, %c0_20], %29 {strides = array<i32>} : memref<8x32xf32, #tpu.memory_space<vmem>>, vector<8x32xf32>,
    %c0_21 = arith.constant 0 : index
    %c0_22 = arith.constant 0 : index
    %31 = vector.load %arg10[%c0_21, %c0_22] : memref<8x1xf32, #tpu.memory_space<vmem>>, vector<8x1xf32>
    tpu.vector_store %arg10[%c0_21, %c0_22], %10 {strides = array<i32>} : memref<8x1xf32, #tpu.memory_space<vmem>>, vector<8x1xf32>,
    %c0_i32_23 = arith.constant 0 : i32
    %32 = arith.cmpi eq, %arg2, %c0_i32_23 : i32
    %33 = arith.extui %32 : i1 to i32
    %c0_i32_24 = arith.constant 0 : i32
    %34 = arith.cmpi ne, %33, %c0_i32_24 : i32
    scf.if %34 {
      %c0_25 = arith.constant 0 : index
      %c0_26 = arith.constant 0 : index
      %35 = vector.load %arg12[%c0_25, %c0_26] : memref<8x32xf32, #tpu.memory_space<vmem>>, vector<8x32xf32>
      %c0_27 = arith.constant 0 : index
      %c0_28 = arith.constant 0 : index
      %36 = vector.load %arg11[%c0_27, %c0_28] : memref<8x1xf32, #tpu.memory_space<vmem>>, vector<8x1xf32>
      %37 = tpu.reciprocal %36 {approx = true} : vector<8x1xf32> -> vector<8x1xf32>
      %38 = vector.broadcast %37 : vector<8x1xf32> to vector<8x32xf32>
      %39 = arith.mulf %35, %38 : vector<8x32xf32>
      %c0_29 = arith.constant 0 : index
      %c0_30 = arith.constant 0 : index
      %c0_31 = arith.constant 0 : index
      %40 = vector.load %arg8[%c0_29, %c0_30, %c0_31] : memref<1x8x32xf32, #tpu.memory_space<vmem>>, vector<1x8x32xf32>
      %41 = vector.shape_cast %40 : vector<1x8x32xf32> to vector<8x32xf32>
      %42 = vector.shape_cast %39 : vector<8x32xf32> to vector<1x8x32xf32>
      tpu.vector_store %arg8[%c0_29, %c0_30, %c0_31], %42 {strides = array<i32>} : memref<1x8x32xf32, #tpu.memory_space<vmem>>, vector<1x8x32xf32>,
    } else {
    }
    return
  }
  func.func @transform_0(%arg0: i32, %arg1: i32, %arg2: i32) -> (i32, i32, i32) {
    %c0_i32 = arith.constant 0 : i32
    %c0_i32_0 = arith.constant 0 : i32
    return %arg0, %arg1, %c0_i32 : i32, i32, i32
  }
  func.func @transform_1(%arg0: i32, %arg1: i32, %arg2: i32) -> (i32, i32, i32) {
    %c0_i32 = arith.constant 0 : i32
    %c0_i32_0 = arith.constant 0 : i32
    return %arg0, %arg2, %c0_i32 : i32, i32, i32
  }
  func.func @transform_2(%arg0: i32, %arg1: i32, %arg2: i32) -> (i32, i32, i32) {
    %c0_i32 = arith.constant 0 : i32
    %c0_i32_0 = arith.constant 0 : i32
    return %arg0, %arg2, %c0_i32 : i32, i32, i32
  }
  func.func @transform_3(%arg0: i32, %arg1: i32, %arg2: i32) -> (i32, i32) {
    %c0_i32 = arith.constant 0 : i32
    %c0_i32_0 = arith.constant 0 : i32
    %c0_i32_1 = arith.constant 0 : i32
    return %c0_i32, %c0_i32_0 : i32, i32
  }
  func.func @transform_4(%arg0: i32, %arg1: i32, %arg2: i32) -> (i32, i32) {
    %c0_i32 = arith.constant 0 : i32
    %c0_i32_0 = arith.constant 0 : i32
    %c0_i32_1 = arith.constant 0 : i32
    return %c0_i32, %c0_i32_0 : i32, i32
  }
  func.func @transform_5(%arg0: i32, %arg1: i32, %arg2: i32) -> (i32, i32, i32) {
    %c0_i32 = arith.constant 0 : i32
    %c0_i32_0 = arith.constant 0 : i32
    return %arg0, %arg1, %c0_i32 : i32, i32, i32
  }
}

</mosaic_0001>

<llo_original>
// kernel: tpu_custom_call.1
$region0: #{tpu_custom_call.1}
  #allocation0 [shape = 'u32[]', space=smem, size = 0x4, offset = 0x4, fixed_abs, tag = 'smem constant byte address 0x4 - core index']
  #allocation1 [shape = 'u32[72,128]{1,0:T(1,128)}', space=vmem, size = 0x9000, scoped, tag = 'internal scratch']
  #allocation2 [shape = 'bf16[8,32]{1,0:T(8,128)(2,1)}', space=vmem, size = 0x800, scoped, tag = 'scratch operand']
  #allocation3 [shape = 'f32[8,1]{1,0:T(8,128)}', space=vmem, size = 0x1000, scoped, tag = 'scratch operand']
  #allocation4 [shape = 'f32[8,1]{1,0:T(8,128)}', space=vmem, size = 0x1000, scoped, tag = 'scratch operand']
  #allocation5 [shape = 'f32[8,32]{1,0:T(8,128)}', space=vmem, size = 0x1000, scoped, tag = 'scratch operand']
  %s0 = inlined_call_operand.hbm [shape: bf16[2,8,32], index: 0, kind: input, shape index: {}]
  %s1 = inlined_call_operand.hbm [shape: bf16[2,8,32], index: 1, kind: input, shape index: {}]
  %s2 = inlined_call_operand.hbm [shape: bf16[2,8,32], index: 2, kind: input, shape index: {}]
  %s3 = inlined_call_operand.hbm [shape: bf16[32,32], index: 3, kind: input, shape index: {}]
  %s4 = inlined_call_operand.vmem [shape: f32[1,32], index: 4, kind: input, shape index: {}]
  %s5 = inlined_call_operand.hbm [shape: f32[2,8,32], index: 5, kind: output, shape index: {}]
  %s6 = sld [smem:[#allocation0]]
  $region77: #{tpu_custom_call.1} parent=0
    _
  %s8 = ssub.s32 1, %s6
  %s9 = scalar_select 0, %s8, %s6
  $region1: #{tpu_custom_call.1} parent=0
    #allocation6 [shape = 'u8[4096]{0}', space=vmem, size = 0x1000, scoped, tag = 'input window, operand 0']
    #allocation7 [shape = 's32[2]{0}', space=sflag, size = 0x8, scoped, tag = 'scoped memory for tpu_custom_call.1']
    #allocation8 [shape = 's32[2]{0}', space=sflag, size = 0x8, scoped, tag = 'scoped memory for tpu_custom_call.1']
    #allocation9 [shape = 'u8[4096]{0}', space=vmem, size = 0x1000, scoped, tag = 'input window, operand 1']
    #allocation10 [shape = 's32[2]{0}', space=sflag, size = 0x8, scoped, tag = 'scoped memory for tpu_custom_call.1']
    #allocation11 [shape = 'u8[4096]{0}', space=vmem, size = 0x1000, scoped, tag = 'input window, operand 2']
    #allocation12 [shape = 'u8[8192]{0}', space=vmem, size = 0x2000, scoped, tag = 'input window, operand 3, single buffered']
    #allocation13 [shape = 's32[1]{0}', space=sflag, size = 0x4, scoped, tag = 'scoped memory for tpu_custom_call.1']
    #allocation14 [shape = 'u8[8192]{0}', space=vmem, size = 0x2000, scoped, tag = 'output window, operand 0']
    %10 = vsyncpa [#allocation7], 0
    %s11 = scalar_lea.sflag [#allocation7], 1
    %12 = vsyncpa %s11, 0
    %13 = vsyncpa [#allocation10], 0
    %s14 = scalar_lea.sflag [#allocation10], 1
    %15 = vsyncpa %s14, 0
    %16 = vsyncpa [#allocation13], 0
    %17 = vsyncpa [#allocation8], 0
    %s18 = scalar_lea.sflag [#allocation8], 1
    %19 = vsyncpa %s18, 0
    loop: start=0, step=1, limit=4
    $region2: #{tpu_custom_call.1} parent=1 // loop_pre_header
      _
    $region3: #{tpu_custom_call.1} parent=1 // loop_header
      %s21 = sphi 0, %s25
      %p22 = scmp.ge.s32.totalorder %s21, 4
      %s28 = sphi 0, %s47
      %s29 = sphi 0, %s43
      %s30 = sphi 0, %s39
      %s31 = sphi 0, %s28
      %s32 = sphi 0, %s29
      %s33 = sphi 0, %s30
      %s34 = sphi 0, %s31
      %s35 = sphi 0, %s32
      %s36 = sphi 0, %s33
      %s52 = sphi 0, %s54
      %s55 = sphi 0, %s52
      %s56 = sphi 0, %s55
      %s72 = sphi 0, %s56
      %s80 = sphi 0, %s82
      %s83 = sphi 0, %s80
      %s84 = sphi 0, %s83
      %s100 = sphi 0, %s84
      %s108 = sphi 0, %s110
      %s111 = sphi 0, %s108
      %s112 = sphi 0, %s111
      %s128 = sphi 0, %s112
      %s132 = sphi 0, %s132
      %s134 = sphi 0, %s132
      %s135 = sphi 0, %s134
      %s149 = sphi 0, %s135
      %s153 = sphi 0, %s153
      %s155 = sphi 0, %s153
      %s156 = sphi 0, %s155
      %s170 = sphi 0, %s156
      %s178 = sphi 0, %s180
      %s181 = sphi 0, %s178
      %s182 = sphi 0, %s181
      %s198 = sphi 0, %s182
    $region4: #{tpu_custom_call.1} parent=1 // loop_header_branch
      %24 = sbr.rel (%p22) target = $region8
    $region5: #{tpu_custom_call.1} parent=1 // loop_body
      %s26 = ssub.s32 %s21, 1
      %s27 = ssub.s32 %s21, 2
      %s37 = sadd.s32 1, %s30
      %p38 = scmp.ge.s32.totalorder %s37, 1
      %s39 = scalar_select %p38, 0, %s37
      %s40 = sadd.s32 1, %s29
      %s41 = scalar_select %p38, %s40, %s29
      %p42 = scmp.ge.s32.totalorder %s41, 1
      %s43 = scalar_select %p42, 0, %s41
      %s44 = sadd.s32 1, %s28
      %s45 = scalar_select %p42, %s44, %s28
      %p46 = scmp.ge.s32.totalorder %s45, 2
      %s47 = scalar_select %p46, 0, %s45
      %s48 = ssub.s32 %s28, %s47
      %s49 = ssub.s32 %s29, %s43
      %s50 = sor.u32 %s48, %s49
      %p51 = scmp.eq.s32.totalorder %s50, 0
      %s53 = sadd.s32 %s52, 1
      %s54 = scalar_select %p51, %s52, %s53
      %p57 = pneg %p51
      %p58 = scmp.eq.s32.totalorder %s21, 1
      %p59 = por %p57, %p58
      %p60 = scmp.ne.s32.totalorder %s52, %s55
      %p61 = scmp.eq.s32.totalorder %s21, 0
      %p62 = por %p60, %p61
      %p63 = scmp.ne.s32.totalorder %s52, %s55
      %p64 = scmp.eq.s32.totalorder %s26, 1
      %p65 = por %p63, %p64
      %p66 = scmp.ne.s32.totalorder %s55, %s56
      %p67 = scmp.eq.s32.totalorder %s26, 0
      %p68 = por %p66, %p67
      %p69 = scmp.ne.s32.totalorder %s55, %s56
      %p70 = scmp.eq.s32.totalorder %s27, 1
      %p71 = por %p69, %p70
      %p73 = scmp.ne.s32.totalorder %s56, %s72
      %p74 = scmp.eq.s32.totalorder %s27, 0
      %p75 = por %p73, %p74
      %s76 = ssub.s32 %s28, %s47
      %s77 = ssub.s32 %s30, %s39
      %s78 = sor.u32 %s76, %s77
      %p79 = scmp.eq.s32.totalorder %s78, 0
      %s81 = sadd.s32 %s80, 1
      %s82 = scalar_select %p79, %s80, %s81
      %p85 = pneg %p79
      %p86 = scmp.eq.s32.totalorder %s21, 1
      %p87 = por %p85, %p86
      %p88 = scmp.ne.s32.totalorder %s80, %s83
      %p89 = scmp.eq.s32.totalorder %s21, 0
      %p90 = por %p88, %p89
      %p91 = scmp.ne.s32.totalorder %s80, %s83
      %p92 = scmp.eq.s32.totalorder %s26, 1
      %p93 = por %p91, %p92
      %p94 = scmp.ne.s32.totalorder %s83, %s84
      %p95 = scmp.eq.s32.totalorder %s26, 0
      %p96 = por %p94, %p95
      %p97 = scmp.ne.s32.totalorder %s83, %s84
      %p98 = scmp.eq.s32.totalorder %s27, 1
      %p99 = por %p97, %p98
      %p101 = scmp.ne.s32.totalorder %s84, %s100
      %p102 = scmp.eq.s32.totalorder %s27, 0
      %p103 = por %p101, %p102
      %s104 = ssub.s32 %s28, %s47
      %s105 = ssub.s32 %s30, %s39
      %s106 = sor.u32 %s104, %s105
      %p107 = scmp.eq.s32.totalorder %s106, 0
      %s109 = sadd.s32 %s108, 1
      %s110 = scalar_select %p107, %s108, %s109
      %p113 = pneg %p107
      %p114 = scmp.eq.s32.totalorder %s21, 1
      %p115 = por %p113, %p114
      %p116 = scmp.ne.s32.totalorder %s108, %s111
      %p117 = scmp.eq.s32.totalorder %s21, 0
      %p118 = por %p116, %p117
      %p119 = scmp.ne.s32.totalorder %s108, %s111
      %p120 = scmp.eq.s32.totalorder %s26, 1
      %p121 = por %p119, %p120
      %p122 = scmp.ne.s32.totalorder %s111, %s112
      %p123 = scmp.eq.s32.totalorder %s26, 0
      %p124 = por %p122, %p123
      %p125 = scmp.ne.s32.totalorder %s111, %s112
      %p126 = scmp.eq.s32.totalorder %s27, 1
      %p127 = por %p125, %p126
      %p129 = scmp.ne.s32.totalorder %s112, %s128
      %p130 = scmp.eq.s32.totalorder %s27, 0
      %p131 = por %p129, %p130
      %s133 = sadd.s32 %s132, 1
      %p136 = scmp.eq.s32.totalorder %s21, 1
      %p137 = scmp.ne.s32.totalorder %s132, %s134
      %p138 = scmp.eq.s32.totalorder %s21, 0
      %p139 = por %p137, %p138
      %p140 = scmp.ne.s32.totalorder %s132, %s134
      %p141 = scmp.eq.s32.totalorder %s26, 1
      %p142 = por %p140, %p141
      %p143 = scmp.ne.s32.totalorder %s134, %s135
      %p144 = scmp.eq.s32.totalorder %s26, 0
      %p145 = por %p143, %p144
      %p146 = scmp.ne.s32.totalorder %s134, %s135
      %p147 = scmp.eq.s32.totalorder %s27, 1
      %p148 = por %p146, %p147
      %p150 = scmp.ne.s32.totalorder %s135, %s149
      %p151 = scmp.eq.s32.totalorder %s27, 0
      %p152 = por %p150, %p151
      %s154 = sadd.s32 %s153, 1
      %p157 = scmp.eq.s32.totalorder %s21, 1
      %p158 = scmp.ne.s32.totalorder %s153, %s155
      %p159 = scmp.eq.s32.totalorder %s21, 0
      %p160 = por %p158, %p159
      %p161 = scmp.ne.s32.totalorder %s153, %s155
      %p162 = scmp.eq.s32.totalorder %s26, 1
      %p163 = por %p161, %p162
      %p164 = scmp.ne.s32.totalorder %s155, %s156
      %p165 = scmp.eq.s32.totalorder %s26, 0
      %p166 = por %p164, %p165
      %p167 = scmp.ne.s32.totalorder %s155, %s156
      %p168 = scmp.eq.s32.totalorder %s27, 1
      %p169 = por %p167, %p168
      %p171 = scmp.ne.s32.totalorder %s156, %s170
      %p172 = scmp.eq.s32.totalorder %s27, 0
      %p173 = por %p171, %p172
      %s174 = ssub.s32 %s28, %s47
      %s175 = ssub.s32 %s29, %s43
      %s176 = sor.u32 %s174, %s175
      %p177 = scmp.eq.s32.totalorder %s176, 0
      %s179 = sadd.s32 %s178, 1
      %s180 = scalar_select %p177, %s178, %s179
      %p183 = pneg %p177
      %p184 = scmp.eq.s32.totalorder %s21, 1
      %p185 = por %p183, %p184
      %p186 = scmp.ne.s32.totalorder %s178, %s181
      %p187 = scmp.eq.s32.totalorder %s21, 0
      %p188 = por %p186, %p187
      %p189 = scmp.ne.s32.totalorder %s178, %s181
      %p190 = scmp.eq.s32.totalorder %s26, 1
      %p191 = por %p189, %p190
      %p192 = scmp.ne.s32.totalorder %s181, %s182
      %p193 = scmp.eq.s32.totalorder %s26, 0
      %p194 = por %p192, %p193
      %p195 = scmp.ne.s32.totalorder %s181, %s182
      %p196 = scmp.eq.s32.totalorder %s27, 1
      %p197 = por %p195, %p196
      %p199 = scmp.ne.s32.totalorder %s182, %s198
      %p200 = scmp.eq.s32.totalorder %s27, 0
      %p201 = por %p199, %p200
      %p202 = scmp.le.s32.totalorder 1, %s21
      %p203 = scmp.lt.s32.totalorder %s21, 3
      %p204 = pnand %p202, %p203
      %p205 = pneg %p204
      // Predicated region
      $region9: #{tpu_custom_call.1} parent=5 // pred_check
        _
      $region10: #{tpu_custom_call.1} parent=5 // pred_check_branch
        %207 = sbr.rel (%p204) target = $region12
      $region11: #{tpu_custom_call.1} parent=5 // pred_region
        %s208 = ssub.s32 %s21, 1
        // Predicated region
        $region13: #{tpu_custom_call.1} parent=11 // pred_check
          %p209 = pneg %p145
        $region14: #{tpu_custom_call.1} parent=11 // pred_check_branch
          %211 = sbr.rel (%p209) target = $region16
        $region15: #{tpu_custom_call.1} parent=11 // pred_region
          %213 = vsyncadd [#allocation13], 0
          %s214 = sshll.u32 %s3, 4
          %s215 = int_to_ptr.hbm [resolvable:$true] %s214
          %s216 = sshll.u32 [#allocation12], 4
          %s217 = int_to_ptr.vmem [resolvable:$true] %s216
          %222 = dma.hbm_to_vmem [thread:$0]  %s215, 256, %s217, [#allocation13], 64, 64, 4
        $region16: #{tpu_custom_call.1} parent=11 // pred_fallthru
          _
        // Predicated region
        $region17: #{tpu_custom_call.1} parent=11 // pred_check
          %p223 = pneg %p166
        $region18: #{tpu_custom_call.1} parent=11 // pred_check_branch
          %225 = sbr.rel (%p223) target = $region20
        $region19: #{tpu_custom_call.1} parent=11 // pred_region
          _
        $region20: #{tpu_custom_call.1} parent=11 // pred_fallthru
          _
      $region12: #{tpu_custom_call.1} parent=5 // pred_fallthru
        _
      %p226 = scmp.lt.s32.totalorder %s21, 2
      // Predicated region
      $region21: #{tpu_custom_call.1} parent=5 // pred_check
        %p227 = pneg %p226
      $region22: #{tpu_custom_call.1} parent=5 // pred_check_branch
        %229 = sbr.rel (%p227) target = $region24
      $region23: #{tpu_custom_call.1} parent=5 // pred_region
        // Predicated region
        $region25: #{tpu_custom_call.1} parent=23 // pred_check
          %p230 = pneg %p62
        $region26: #{tpu_custom_call.1} parent=23 // pred_check_branch
          %232 = sbr.rel (%p230) target = $region28
        $region27: #{tpu_custom_call.1} parent=23 // pred_region
          %s233 = sand.u32 %s52, 1
          %s234 = scalar_lea.sflag [#allocation7], %s233
          %s235 = sand.u32 %s52, 1
          %s236 = smul.addr %s235, 4
          %s237 = scalar_lea.vmem [#allocation6], %s236
          %239 = vsyncadd %s234, 0
          %s240 = sadd.s32 %s29, %s28
          %s241 = smul.addr %s240, 4
          %s242 = scalar_lea.hbm %s0, %s241
          %s244 = sshll.u32 %s242, 4
          %s245 = int_to_ptr.hbm [resolvable:$true] %s244
          %s246 = sshll.u32 %s237, 4
          %s247 = int_to_ptr.vmem [resolvable:$true] %s246
          %249 = dma.hbm_to_vmem [thread:$0]  %s245, 64, %s247, %s234
        $region28: #{tpu_custom_call.1} parent=23 // pred_fallthru
          _
        // Predicated region
        $region29: #{tpu_custom_call.1} parent=23 // pred_check
          %p250 = pneg %p90
        $region30: #{tpu_custom_call.1} parent=23 // pred_check_branch
          %252 = sbr.rel (%p250) target = $region32
        $region31: #{tpu_custom_call.1} parent=23 // pred_region
          %s253 = sand.u32 %s21, 1
          %s254 = scalar_lea.sflag [#allocation10], %s253
          %s255 = sand.u32 %s80, 1
          %s256 = smul.addr %s255, 4
          %s257 = scalar_lea.vmem [#allocation9], %s256
          %259 = vsyncadd %s254, 0
          %s260 = sadd.s32 %s30, %s28
          %s261 = smul.addr %s260, 4
          %s262 = scalar_lea.hbm %s1, %s261
          %s264 = sshll.u32 %s262, 4
          %s265 = int_to_ptr.hbm [resolvable:$true] %s264
          %s266 = sshll.u32 %s257, 4
          %s267 = int_to_ptr.vmem [resolvable:$true] %s266
          %269 = dma.hbm_to_vmem [thread:$0]  %s265, 64, %s267, %s254
        $region32: #{tpu_custom_call.1} parent=23 // pred_fallthru
          _
        // Predicated region
        $region33: #{tpu_custom_call.1} parent=23 // pred_check
          %p270 = pneg %p118
        $region34: #{tpu_custom_call.1} parent=23 // pred_check_branch
          %272 = sbr.rel (%p270) target = $region36
        $region35: #{tpu_custom_call.1} parent=23 // pred_region
          %s273 = sand.u32 %s21, 1
          %s274 = scalar_lea.sflag [#allocation10], %s273
          %s275 = sand.u32 %s108, 1
          %s276 = smul.addr %s275, 4
          %s277 = scalar_lea.vmem [#allocation11], %s276
          %279 = vsyncadd %s274, 0
          %s280 = sadd.s32 %s30, %s28
          %s281 = smul.addr %s280, 4
          %s282 = scalar_lea.hbm %s2, %s281
          %s284 = sshll.u32 %s282, 4
          %s285 = int_to_ptr.hbm [resolvable:$true] %s284
          %s286 = sshll.u32 %s277, 4
          %s287 = int_to_ptr.vmem [resolvable:$true] %s286
          %289 = dma.hbm_to_vmem [thread:$0]  %s285, 64, %s287, %s274
        $region36: #{tpu_custom_call.1} parent=23 // pred_fallthru
          _
      $region24: #{tpu_custom_call.1} parent=5 // pred_fallthru
        _
      %p290 = scmp.le.s32.totalorder 1, %s21
      %p291 = scmp.lt.s32.totalorder %s21, 3
      %p292 = pnand %p290, %p291
      %p293 = pneg %p292
      // Predicated region
      $region37: #{tpu_custom_call.1} parent=5 // pred_check
        _
      $region38: #{tpu_custom_call.1} parent=5 // pred_check_branch
        %295 = sbr.rel (%p292) target = $region40
      $region39: #{tpu_custom_call.1} parent=5 // pred_region
        %s296 = ssub.s32 %s21, 1
        %s297 = sand.u32 %s55, 1
        %s298 = scalar_lea.sflag [#allocation7], %s297
        %s299 = sand.u32 %s55, 1
        %s300 = smul.addr %s299, 4
        %s301 = scalar_lea.vmem [#allocation6], %s300
        // Predicated region
        $region41: #{tpu_custom_call.1} parent=39 // pred_check
          %p302 = pneg %p68
        $region42: #{tpu_custom_call.1} parent=39 // pred_check_branch
          %304 = sbr.rel (%p302) target = $region44
        $region43: #{tpu_custom_call.1} parent=39 // pred_region
          %306 = dma.done %s298, 64
        $region44: #{tpu_custom_call.1} parent=39 // pred_fallthru
          _
        %s307 = sand.u32 %s26, 1
        %s308 = scalar_lea.sflag [#allocation10], %s307
        %s309 = sand.u32 %s83, 1
        %s310 = smul.addr %s309, 4
        %s311 = scalar_lea.vmem [#allocation9], %s310
        // Predicated region
        $region45: #{tpu_custom_call.1} parent=39 // pred_check
          %p312 = pneg %p96
        $region46: #{tpu_custom_call.1} parent=39 // pred_check_branch
          %314 = sbr.rel (%p312) target = $region48
        $region47: #{tpu_custom_call.1} parent=39 // pred_region
          %316 = dma.done %s308, 64
        $region48: #{tpu_custom_call.1} parent=39 // pred_fallthru
          _
        %s317 = sand.u32 %s26, 1
        %s318 = scalar_lea.sflag [#allocation10], %s317
        %s319 = sand.u32 %s111, 1
        %s320 = smul.addr %s319, 4
        %s321 = scalar_lea.vmem [#allocation11], %s320
        // Predicated region
        $region49: #{tpu_custom_call.1} parent=39 // pred_check
          %p322 = pneg %p124
        $region50: #{tpu_custom_call.1} parent=39 // pred_check_branch
          %324 = sbr.rel (%p322) target = $region52
        $region51: #{tpu_custom_call.1} parent=39 // pred_region
          %326 = dma.done %s318, 64
        $region52: #{tpu_custom_call.1} parent=39 // pred_fallthru
          _
        // Predicated region
        $region53: #{tpu_custom_call.1} parent=39 // pred_check
          %p327 = pneg %p145
        $region54: #{tpu_custom_call.1} parent=39 // pred_check_branch
          %329 = sbr.rel (%p327) target = $region56
        $region55: #{tpu_custom_call.1} parent=39 // pred_region
          %331 = dma.done [#allocation13], 256
        $region56: #{tpu_custom_call.1} parent=39 // pred_fallthru
          _
        %s332 = sand.u32 %s55, 1
        %s333 = scalar_lea.sflag [#allocation7], %s332
        %s334 = sand.u32 %s55, 1
        %s335 = smul.addr %s334, 4
        %s336 = scalar_lea.vmem [#allocation6], %s335
        %p337 = pneg %p68
        %p338 = pneg %p65
        %s339 = sand.u32 %s26, 1
        %s340 = scalar_lea.sflag [#allocation10], %s339
        %s341 = sand.u32 %s83, 1
        %s342 = smul.addr %s341, 4
        %s343 = scalar_lea.vmem [#allocation9], %s342
        %p344 = pneg %p96
        %p345 = pneg %p93
        %s346 = sand.u32 %s26, 1
        %s347 = scalar_lea.sflag [#allocation10], %s346
        %s348 = sand.u32 %s111, 1
        %s349 = smul.addr %s348, 4
        %s350 = scalar_lea.vmem [#allocation11], %s349
        %p351 = pneg %p124
        %p352 = pneg %p121
        %p353 = pneg %p145
        %p354 = pneg %p142
        %p355 = pneg %p166
        %p356 = pneg %p163
        %p357 = pneg %p194
        %p358 = pneg %p191
        %s359 = sand.u32 %s181, 1
        %s360 = scalar_lea.sflag [#allocation8], %s359
        %s361 = sand.u32 %s181, 1
        %s362 = smul.addr %s361, 8
        %s363 = scalar_lea.vmem [#allocation14], %s362
        %p365 = scmp.eq.s32.totalorder %s33, 0
        // Predicated region
        $region57: #{tpu_custom_call.1} parent=39 // pred_check
          %p366 = pneg %p365
        $region58: #{tpu_custom_call.1} parent=39 // pred_check_branch
          %368 = sbr.rel (%p366) target = $region60
        $region59: #{tpu_custom_call.1} parent=39 // pred_region
          %v369 = vld [vmem:[%s301] sm:$0xf]
          %v370 = vld [vmem:[#allocation12] sm:$0xf]
          %v371 = vld [vmem:[#allocation12 + $0x4] sm:$0xf]
          %v372 = vld [vmem:[#allocation12 + $0x8] sm:$0xf]
          %v373 = vld [vmem:[#allocation12 + $0xc] sm:$0xf]
          %v374 = vld [vmem:[%s4] sm:$0x1]
          %v376 = vperm.slane %v374, 0
          %v382 = vunpack.c.l.b16 %v370
          %v383 = vunpack.c.l.b16 %v371
          %v384 = vunpack.c.l.b16 %v372
          %v385 = vunpack.c.l.b16 %v373
          %v386 = vpack.c.b16 %v383, %v382
          %v387 = vpack.c.b16 %v385, %v384
          %vm390 = vcmask 261120
          %v392 = vsel %vm390, %v369, 0
          %394 = vmatpush.bf16.msra.mxu0 0
          %395 = vmatpush.bf16.msra.mxu0 0
          %396 = vmatpush.bf16.msra.mxu0 0
          %397 = vmatpush.bf16.msra.mxu0 0
          %398 = vmatpush.bf16.msra.mxu0 0
          %399 = vmatpush.bf16.msra.mxu0 0
          %400 = vmatpush.bf16.msra.mxu0 %v387
          %401 = vmatpush.bf16.msra.mxu0 %v386
          %402 = vmatmul.bf16.gmra.mxu0 %v392
          %v403 = vpop.f32.mrf.mxu0
          %v404 = vadd.f32 %v376, %v403
          %v405 = vpop.f32.mrf.mxu0
          %406 = vdwg.mxu0
          %v407 = vmul.f32 %v404, 0.17677669
          %v408 = vpack.c.bf16 %v407, %v407
          %vm409 = vcmask 257024
          %410 = vst.msk [vmem:[#allocation2] sm:$0xf] %vm409, %v408
          %vm411 = vcmask 7168
          %412 = vst.msk [vmem:[#allocation3] sm:$0xff] %vm411, -inf
          %413 = vst.msk [vmem:[#allocation4] sm:$0xff] %vm411, 0.0
          %414 = vst.msk [vmem:[#allocation5] sm:$0xff] %vm390, 0.0
        $region60: #{tpu_custom_call.1} parent=39 // pred_fallthru
          _
        %v415 = vld [vmem:[#allocation2] sm:$0xf]
        %v416 = vld [vmem:[%s311] sm:$0xf]
        %vm417 = vcmask 261120
        %v419 = vsel %vm417, %v415, 0
        %v422 = vsel %vm417, %v416, 0
        %424 = vmatpush.bf16.xpose.msra.mxu0 0
        %425 = vmatpush.bf16.xpose.msra.mxu0 0
        %426 = vmatpush.bf16.xpose.msra.mxu0 0
        %427 = vmatpush.bf16.xpose.msra.mxu0 0
        %428 = vmatpush.bf16.xpose.msra.mxu0 0
        %429 = vmatpush.bf16.xpose.msra.mxu0 0
        %430 = vmatpush.bf16.xpose.msra.mxu0 0
        %431 = vmatpush.bf16.xpose.msra.mxu0 %v422
        %432 = vmatmul.bf16.gmra.mxu0 %v419
        %v433 = vpop.f32.mrf.mxu0
        %v434 = vadd.f32 0.0, %v433
        %v435 = vpop.f32.mrf.mxu0
        %436 = vdwg.mxu0
        %v437 = vld [vmem:[#allocation3] sm:$0xff]
        %vm438 = vcmask 64512
        %v439 = vsel %vm438, %v434, -inf
        %440 = vmax.xlane.f32.xlu0 %v439
        %v441 = vpop.xlane.xlu0 %440
        %v442 = vmax.f32 %v437, %v441
        %v443 = vsub.f32 %v437, %v442
        %v444 = vmul.f32 %v443, 1.442695
        %v445 = vpow.pop %v444
        %447 = vset.pattern.permute.xlu0 0
        %448 = vperm.xlu0 %447, %v442
        %v449 = vpop.permute.xlu0 %448
        %v451 = vsub.f32 %v434, %v449
        %v452 = vmul.f32 %v451, 1.442695
        %v453 = vpow.pop %v452
        %v454 = vld [vmem:[#allocation4] sm:$0xff]
        %v455 = vmul.f32 %v445, %v454
        %v456 = vsel %vm438, %v453, 0.0
        %457 = vadd.xlane.f32.xlu0 %v456
        %v458 = vpop.xlane.xlu0 %457
        %v459 = vadd.f32 %v455, %v458
        %vm460 = vcmask 7168
        %461 = vst.msk [vmem:[#allocation4] sm:$0xff] %vm460, %v459
        %v462 = vld [vmem:[#allocation5] sm:$0xff]
        %464 = vset.pattern.permute.xlu0 0
        %465 = vperm.xlu0 %464, %v445
        %v466 = vpop.permute.xlu0 %465
        %v468 = vmul.f32 %v466, %v462
        %v469 = vpack.c.bf16 %v453, %v453
        %v470 = vld [vmem:[%s321] sm:$0xf]
        %v472 = vsel %vm438, %v469, 0
        %vm474 = vcmask 1043456
        %v476 = vsel %vm474, %v470, 0
        %478 = vmatpush.bf16.msra.mxu0 0
        %479 = vmatpush.bf16.msra.mxu0 0
        %480 = vmatpush.bf16.msra.mxu0 0
        %481 = vmatpush.bf16.msra.mxu0 0
        %482 = vmatpush.bf16.msra.mxu0 0
        %483 = vmatpush.bf16.msra.mxu0 0
        %484 = vmatpush.bf16.msra.mxu0 0
        %485 = vmatpush.bf16.msra.mxu0 %v476
        %486 = vmatmul.bf16.gmra.mxu0 %v472
        %v487 = vpop.f32.mrf.mxu0
        %v488 = vadd.f32 0.0, %v487
        %v489 = vpop.f32.mrf.mxu0
        %490 = vdwg.mxu0
        %v491 = vadd.f32 %v468, %v488
        %492 = vst.msk [vmem:[#allocation5] sm:$0xff] %vm417, %v491
        %493 = vst.msk [vmem:[#allocation3] sm:$0xff] %vm460, %v442
        // Predicated region
        $region61: #{tpu_custom_call.1} parent=39 // pred_check
          %p494 = pneg %p365
        $region62: #{tpu_custom_call.1} parent=39 // pred_check_branch
          %496 = sbr.rel (%p494) target = $region64
        $region63: #{tpu_custom_call.1} parent=39 // pred_region
          %v497 = vld [vmem:[#allocation5] sm:$0xff]
          %v498 = vld [vmem:[#allocation4] sm:$0xff]
          %v499 = vrcp.pop %v498
          %501 = vset.pattern.permute.xlu0 0
          %502 = vperm.xlu0 %501, %v499
          %v503 = vpop.permute.xlu0 %502
          %v505 = vmul.f32 %v497, %v503
          %506 = vst.msk [vmem:[%s363] sm:$0xff] %vm417, %v505
        $region64: #{tpu_custom_call.1} parent=39 // pred_fallthru
          _
        %s507 = sand.u32 %s181, 1
        %s508 = scalar_lea.sflag [#allocation8], %s507
        %s509 = sand.u32 %s181, 1
        %s510 = smul.addr %s509, 8
        %s511 = scalar_lea.vmem [#allocation14], %s510
        // Predicated region
        $region65: #{tpu_custom_call.1} parent=39 // pred_check
          %p512 = pneg %p191
        $region66: #{tpu_custom_call.1} parent=39 // pred_check_branch
          %514 = sbr.rel (%p512) target = $region68
        $region67: #{tpu_custom_call.1} parent=39 // pred_region
          %516 = vsyncadd %s508, 0
          %s517 = sadd.s32 %s32, %s31
          %s518 = smul.addr %s517, 8
          %s519 = scalar_lea.hbm %s5, %s518
          %s521 = sshll.u32 %s511, 4
          %s522 = int_to_ptr.vmem [resolvable:$true] %s521
          %s523 = sshll.u32 %s519, 4
          %s524 = int_to_ptr.hbm [resolvable:$true] %s523
          %526 = dma.vmem_to_hbm [thread:$0]  %s522, 128, %s524, %s508
        $region68: #{tpu_custom_call.1} parent=39 // pred_fallthru
          _
      $region40: #{tpu_custom_call.1} parent=5 // pred_fallthru
        _
      %p527 = scmp.le.s32.totalorder 2, %s21
      // Predicated region
      $region69: #{tpu_custom_call.1} parent=5 // pred_check
        %p528 = pneg %p527
      $region70: #{tpu_custom_call.1} parent=5 // pred_check_branch
        %530 = sbr.rel (%p528) target = $region72
      $region71: #{tpu_custom_call.1} parent=5 // pred_region
        %s531 = ssub.s32 %s21, 2
        // Predicated region
        $region73: #{tpu_custom_call.1} parent=71 // pred_check
          %p532 = pneg %p197
        $region74: #{tpu_custom_call.1} parent=71 // pred_check_branch
          %534 = sbr.rel (%p532) target = $region76
        $region75: #{tpu_custom_call.1} parent=71 // pred_region
          %s535 = sand.u32 %s182, 1
          %s536 = scalar_lea.sflag [#allocation8], %s535
          %s537 = sand.u32 %s182, 1
          %s538 = smul.addr %s537, 8
          %s539 = scalar_lea.vmem [#allocation14], %s538
          %541 = dma.done %s536, 128
        $region76: #{tpu_custom_call.1} parent=71 // pred_fallthru
          _
      $region72: #{tpu_custom_call.1} parent=5 // pred_fallthru
        _
    $region6: #{tpu_custom_call.1} parent=1 // loop_footer
      %s25 = sadd.s32 1, %s21
    $region7: #{tpu_custom_call.1} parent=1 // loop_footer_branch
      %20 = sbr.rel target = $region3
    $region8: #{tpu_custom_call.1} parent=1 // loop_exit
      _
    %542 = vsyncpa [#allocation7], 1
    %s543 = scalar_lea.sflag [#allocation7], 1
    %544 = vsyncpa %s543, 1
    %545 = vsyncpa [#allocation10], 1
    %s546 = scalar_lea.sflag [#allocation10], 1
    %547 = vsyncpa %s546, 1
    %548 = vsyncpa [#allocation13], 1
    %549 = vsyncpa [#allocation8], 1
    %s550 = scalar_lea.sflag [#allocation8], 1
    %551 = vsyncpa %s550, 1

</llo_original>
